<compile_context>
chip_gen: v6e
topology: v6e:2x2x1
jax: 0.10.0
libtpu: 0.0.40
codegen_flags: <defaults>
</compile_context>

<pallas_src>
import jax
import jax.numpy as jnp
from jax import lax
from jax.experimental import pallas as pl
from jax.experimental.pallas import tpu as pltpu

EPS = 1e-5  # PyTorch BatchNorm1d default eps

VIDEO_EMBED = 2048
TEXT_EMBED = 128
VIDEO_SIZE = 30
TEXT_SIZE = 16
FINAL_IN = VIDEO_SIZE + 1 + TEXT_SIZE + 1          # 48
FINAL_HID = 2 * FINAL_IN                           # 96
FINAL_IN_NT = FINAL_IN - TEXT_SIZE                 # 32
FINAL_HID_NT = 2 * FINAL_IN_NT                     # 64

VPAD = 32                                          # video column padded 30 -> 32 lanes
XV_W = TEXT_EMBED + VPAD                           # 160 packed input lanes (text branch)


# ----------------------------------------------------------------------------
# Kernels (all BatchNorms already folded into the weights/biases)
# ----------------------------------------------------------------------------
def posts_kernel_text(xv_ref, wtT_ref, w1_ref, vp_ref, sc_ref, out_ref):
    # xv_ref : (1, 160)  lanes 0:128 = text embedding, 128:158 = video col, 158:160 = 0
    # wtT_ref: (16, 128) folded squeeze_text weight, stored transposed (lane-dense)
    # w1_ref : (48, 96)  folded final_fc first Linear: rows 0:32 video part (2 zero
    #                    rows of padding), rows 32:48 text part
    # vp_ref : (8, 96)   row0=b1F, row1=w1hF, row2=w1sF, row3=w2^T, row4[:16]=btF
    # sc_ref : (4,) SMEM [hashtags_score, sound_score, b2, 0]
    text = xv_ref[:, 0:TEXT_EMBED]                     # (1, 128)
    vpad = xv_ref[:, TEXT_EMBED:XV_W]                  # (1, 32)

    # squeeze_text (Linear+BN1 folded) -> ReLU    ((1,128) · (16,128)^T -> (1,16))
    t = lax.dot_general(text, wtT_ref[...],
                        dimension_numbers=(((1,), (1,)), ((), ())),
                        preferred_element_type=jnp.float32)
    t = jnp.maximum(t + vp_ref[4:5, 0:TEXT_SIZE], 0.0)

    h = sc_ref[0]
    s = sc_ref[1]
    b2 = sc_ref[2]

    # final_fc first Linear (+BN2 of squeeze_text and BNf folded in) -> ReLU
    z = (jnp.dot(vpad, w1_ref[0:VPAD, :], preferred_element_type=jnp.float32)
         + jnp.dot(t, w1_ref[VPAD:VPAD + TEXT_SIZE, :], preferred_element_type=jnp.float32)
         + h * vp_ref[1:2, :]
         + s * vp_ref[2:3, :]
         + vp_ref[0:1, :])
    z = jnp.maximum(z, 0.0)

    # 96 -> 1 head as VPU multiply + lane reduction (no N=1 MXU pass), then sigmoid.
    o = jnp.sum(z * vp_ref[3:4, :], axis=-1, keepdims=True) + b2
    out_ref[...] = jax.nn.sigmoid(o)


def posts_kernel_no_text(xv_ref, w1_ref, vp_ref, sc_ref, out_ref):
    # xv_ref : (1, 32)   lanes 0:30 = video col, 30:32 = 0
    # w1_ref : (32, 64)  folded final_fc_no_text first Linear (rows 30:32 zero)
    # vp_ref : (8, 64)   row0=b1F, row1=w1hF, row2=w1sF, row3=w2^T
    # sc_ref : (4,) SMEM [hashtags_score, sound_score, b2, 0]
    h = sc_ref[0]
    s = sc_ref[1]
    b2 = sc_ref[2]

    z = (jnp.dot(xv_ref[...], w1_ref[...], preferred_element_type=jnp.float32)
         + h * vp_ref[1:2, :]
         + s * vp_ref[2:3, :]
         + vp_ref[0:1, :])
    z = jnp.maximum(z, 0.0)

    o = jnp.sum(z * vp_ref[3:4, :], axis=-1, keepdims=True) + b2
    out_ref[...] = jax.nn.sigmoid(o)


# ----------------------------------------------------------------------------
# Raw (PyTorch-style) parameter init — used by the pure-JAX reference.
# ----------------------------------------------------------------------------
def init_params(key):
    ks = iter(jax.random.split(key, 32))

    def linear(fan_in, fan_out):
        bound = 1.0 / jnp.sqrt(float(fan_in))
        w = jax.random.uniform(next(ks), (fan_in, fan_out), jnp.float32, -bound, bound)
        b = jax.random.uniform(next(ks), (1, fan_out), jnp.float32, -bound, bound)
        return w, b

    def bn(n):
        g = jax.random.uniform(next(ks), (1, n), jnp.float32, 0.5, 1.5)
        b = jax.random.uniform(next(ks), (1, n), jnp.float32, -0.5, 0.5)
        m = jax.random.uniform(next(ks), (1, n), jnp.float32, -0.5, 0.5)
        v = jax.random.uniform(next(ks), (1, n), jnp.float32, 0.5, 1.5)
        return g, b, m, v

    p = {}
    # squeeze_text: Linear(128->16) -> BN(16) -> ReLU -> Dropout(0) -> BN(16)
    p["wt"], p["bt"] = linear(TEXT_EMBED, TEXT_SIZE)
    p["bn1_g"], p["bn1_b"], p["bn1_m"], p["bn1_v"] = bn(TEXT_SIZE)
    p["bn2_g"], p["bn2_b"], p["bn2_m"], p["bn2_v"] = bn(TEXT_SIZE)

    # final_fc: Linear(48->96) -> BN(96) -> ReLU -> Dropout(0) -> Linear(96->1) -> Sigmoid
    w1, p["b1"] = linear(FINAL_IN, FINAL_HID)
    p["w1v"] = w1[:VIDEO_SIZE, :]
    p["w1t"] = w1[VIDEO_SIZE:VIDEO_SIZE + TEXT_SIZE, :]
    p["w1h"] = w1[VIDEO_SIZE + TEXT_SIZE:VIDEO_SIZE + TEXT_SIZE + 1, :]
    p["w1s"] = w1[VIDEO_SIZE + TEXT_SIZE + 1:, :]
    p["bnf_g"], p["bnf_b"], p["bnf_m"], p["bnf_v"] = bn(FINAL_HID)
    p["w2"], p["b2"] = linear(FINAL_HID, 1)

    # final_fc_no_text: Linear(32->64) -> BN(64) -> ReLU -> Dropout(0) -> Linear(64->1) -> Sigmoid
    w1n, p["nt_b1"] = linear(FINAL_IN_NT, FINAL_HID_NT)
    p["nt_w1v"] = w1n[:VIDEO_SIZE, :]
    p["nt_w1h"] = w1n[VIDEO_SIZE:VIDEO_SIZE + 1, :]
    p["nt_w1s"] = w1n[VIDEO_SIZE + 1:, :]
    p["nt_bn_g"], p["nt_bn_b"], p["nt_bn_m"], p["nt_bn_v"] = bn(FINAL_HID_NT)
    p["nt_w2"], p["nt_b2"] = linear(FINAL_HID_NT, 1)
    return p


# ----------------------------------------------------------------------------
# One-time BatchNorm folding + operand packing for the kernels.
# ----------------------------------------------------------------------------
def fold_params(p):
    # ---- text branch ----
    s1 = p["bn1_g"] * lax.rsqrt(p["bn1_v"] + EPS)                  # (1,16)
    wtF = p["wt"] * s1                                             # (128,16)
    btF = (p["bt"] - p["bn1_m"]) * s1 + p["bn1_b"]                 # (1,16)

    s2 = p["bn2_g"] * lax.rsqrt(p["bn2_v"] + EPS)                  # (1,16)
    c2 = p["bn2_b"] - p["bn2_m"] * s2                              # (1,16)

    sf = p["bnf_g"] * lax.rsqrt(p["bnf_v"] + EPS)                  # (1,96)
    w1vF = p["w1v"] * sf                                           # (30,96)
    w1tF = (p["w1t"] * s2.T) * sf                                  # (16,96)
    w1hF = p["w1h"] * sf                                           # (1,96)
    w1sF = p["w1s"] * sf                                           # (1,96)
    b1F = (p["b1"] + c2 @ p["w1t"] - p["bnf_m"]) * sf + p["bnf_b"]  # (1,96)

    w1_pack = jnp.zeros((VPAD + TEXT_SIZE, FINAL_HID), jnp.float32)
    w1_pack = w1_pack.at[:VIDEO_SIZE, :].set(w1vF)
    w1_pack = w1_pack.at[VPAD:, :].set(w1tF)

    vpack = jnp.zeros((8, FINAL_HID), jnp.float32)
    vpack = vpack.at[0, :].set(b1F[0])
    vpack = vpack.at[1, :].set(w1hF[0])
    vpack = vpack.at[2, :].set(w1sF[0])
    vpack = vpack.at[3, :].set(p["w2"][:, 0])
    vpack = vpack.at[4, :TEXT_SIZE].set(btF[0])

    text_kp = {
        "wtT": jnp.asarray(wtF.T),          # (16,128) lane-dense
        "w1": w1_pack,                      # (48,96)
        "vpack": vpack,                     # (8,96)
        "b2": p["b2"].reshape(1),           # (1,)
    }

    # ---- no-text branch ----
    sn = p["nt_bn_g"] * lax.rsqrt(p["nt_bn_v"] + EPS)              # (1,64)
    w1vFn = p["nt_w1v"] * sn
    w1hFn = p["nt_w1h"] * sn
    w1sFn = p["nt_w1s"] * sn
    b1Fn = (p["nt_b1"] - p["nt_bn_m"]) * sn + p["nt_bn_b"]

    w1n_pack = jnp.zeros((VPAD, FINAL_HID_NT), jnp.float32)
    w1n_pack = w1n_pack.at[:VIDEO_SIZE, :].set(w1vFn)

    vpack_nt = jnp.zeros((8, FINAL_HID_NT), jnp.float32)
    vpack_nt = vpack_nt.at[0, :].set(b1Fn[0])
    vpack_nt = vpack_nt.at[1, :].set(w1hFn[0])
    vpack_nt = vpack_nt.at[2, :].set(w1sFn[0])
    vpack_nt = vpack_nt.at[3, :].set(p["nt_w2"][:, 0])

    nt_kp = {
        "w1": w1n_pack,                     # (32,64)
        "vpack": vpack_nt,                  # (8,64)
        "b2": p["nt_b2"].reshape(1),        # (1,)
    }

    return {"text": text_kp, "no_text": nt_kp}


# ----------------------------------------------------------------------------
# Jitted wrappers (one fused executable per branch).
# ----------------------------------------------------------------------------
_VMEM = pl.BlockSpec(memory_space=pltpu.MemorySpace.VMEM)
_SMEM = pl.BlockSpec(memory_space=pltpu.MemorySpace.SMEM)


def _vcol_from_video(video):
    # squeeze()[:, 0] -> (1, 30): column-0 extraction stays in XLA (inside the jit),
    # so the 240 KiB video tensor never enters the kernel.
    v = video.astype(jnp.float32).reshape(VIDEO_SIZE, VIDEO_EMBED)
    return v[:, 0].reshape(1, VIDEO_SIZE)


def _scalars(h, s, b2):
    return jnp.concatenate([
        h.astype(jnp.float32).reshape(1),
        s.astype(jnp.float32).reshape(1),
        b2.reshape(1),
        jnp.zeros((1,), jnp.float32),
    ])


@jax.jit
def _forward_text_jit(video, text, h, s, kp):
    vcol = _vcol_from_video(video)
    text = text.astype(jnp.float32).reshape(1, TEXT_EMBED)
    xv = jnp.concatenate(
        [text, vcol, jnp.zeros((1, VPAD - VIDEO_SIZE), jnp.float32)], axis=-1)  # (1,160)
    scal = _scalars(h, s, kp["b2"])
    return pl.pallas_call(
        posts_kernel_text,
        out_shape=jax.ShapeDtypeStruct((1, 1), jnp.float32),
        in_specs=[_VMEM, _VMEM, _VMEM, _VMEM, _SMEM],
        out_specs=_VMEM,
    )(xv, kp["wtT"], kp["w1"], kp["vpack"], scal)


@jax.jit
def _forward_no_text_jit(video, h, s, kp):
    vcol = _vcol_from_video(video)
    xv = jnp.concatenate(
        [vcol, jnp.zeros((1, VPAD - VIDEO_SIZE), jnp.float32)], axis=-1)        # (1,32)
    scal = _scalars(h, s, kp["b2"])
    return pl.pallas_call(
        posts_kernel_no_text,
        out_shape=jax.ShapeDtypeStruct((1, 1), jnp.float32),
        in_specs=[_VMEM, _VMEM, _VMEM, _SMEM],
        out_specs=_VMEM,
    )(xv, kp["w1"], kp["vpack"], scal)


def posts_model_forward(post, kernel_params):
    # Python-level branch, same as the torch forward.
    if bool(post["text"][0]):
        return _forward_text_jit(post["video_embeded"], post["text_embeded"],
                                 post["hashtags_score"], post["sound"],
                                 kernel_params["text"])
    else:
        return _forward_no_text_jit(post["video_embeded"],
                                    post["hashtags_score"], post["sound"],
                                    kernel_params["no_text"])


# ----------------------------------------------------------------------------
# Pure-JAX reference (mirrors the torch forward exactly, with RAW params).
# ----------------------------------------------------------------------------
def _bn(x, g, b, m, v):
    return (x - m) * g * lax.rsqrt(v + EPS) + b


def posts_model_reference(post, params):
    video = post["video_embeded"].astype(jnp.float32)
    h = post["hashtags_score"].astype(jnp.float32).reshape(-1, 1)
    s = post["sound"].astype(jnp.float32).reshape(-1, 1)
    vcol = jnp.squeeze(video)[:, 0].reshape(1, -1)
    if bool(post["text"][0]):
        text = post["text_embeded"].astype(jnp.float32)
        t = text @ params["wt"] + params["bt"]
        t = _bn(t, params["bn1_g"], params["bn1_b"], params["bn1_m"], params["bn1_v"])
        t = jnp.maximum(t, 0.0)
        t = _bn(t, params["bn2_g"], params["bn2_b"], params["bn2_m"], params["bn2_v"])
        x = jnp.concatenate([vcol, t, h, s], axis=-1)
        w1 = jnp.concatenate([params["w1v"], params["w1t"], params["w1h"], params["w1s"]], 0)
        z = x @ w1 + params["b1"]
        z = _bn(z, params["bnf_g"], params["bnf_b"], params["bnf_m"], params["bnf_v"])
        z = jnp.maximum(z, 0.0)
        return jax.nn.sigmoid(z @ params["w2"] + params["b2"])
    else:
        x = jnp.concatenate([vcol, h, s], axis=-1)
        w1 = jnp.concatenate([params["nt_w1v"], params["nt_w1h"], params["nt_w1s"]], 0)
        z = x @ w1 + params["nt_b1"]
        z = _bn(z, params["nt_bn_g"], params["nt_bn_b"], params["nt_bn_m"], params["nt_bn_v"])
        z = jnp.maximum(z, 0.0)
        return jax.nn.sigmoid(z @ params["nt_w2"] + params["nt_b2"])


if __name__ == "__main__":
    key = jax.random.PRNGKey(0)
    k_params, k_vid, k_txt, k_hash, k_snd = jax.random.split(key, 5)

    raw_params = init_params(k_params)
    kernel_params = fold_params(raw_params)

    post = {
        "video_embeded": jax.random.normal(k_vid, (1, VIDEO_SIZE, VIDEO_EMBED), jnp.float32),
        "text_embeded": jax.random.normal(k_txt, (1, TEXT_EMBED), jnp.float32),
        "hashtags_score": jax.random.uniform(k_hash, (1,), jnp.float32),
        "sound": jax.random.uniform(k_snd, (1,), jnp.float32),
        "text": ["some caption text"],  # truthy -> text branch (final_fc)
    }

    # with-text branch
    out = jax.block_until_ready(posts_model_forward(post, kernel_params))
    ref = posts_model_reference(post, raw_params)
    assert out.shape == (1, 1)
    assert jnp.allclose(out, ref, atol=5e-5, rtol=1e-4), (out, ref)

    # no-text branch
    post_nt = dict(post)
    post_nt["text"] = [""]  # falsy -> final_fc_no_text
    out_nt = jax.block_until_ready(posts_model_forward(post_nt, kernel_params))
    ref_nt = posts_model_reference(post_nt, raw_params)
    assert out_nt.shape == (1, 1)
    assert jnp.allclose(out_nt, ref_nt, atol=5e-5, rtol=1e-4), (out_nt, ref_nt)

    print("KERNEL_OK")
</pallas_src>

<mosaic_0001>
module attributes {stable_mosaic.version = 11 : i64} {
  func.func @posts_kernel_text(%arg0: memref<1x160xf32, #tpu.memory_space<vmem>>, %arg1: memref<16x128xf32, #tpu.memory_space<vmem>>, %arg2: memref<48x96xf32, #tpu.memory_space<vmem>>, %arg3: memref<8x96xf32, #tpu.memory_space<vmem>>, %arg4: memref<4xf32, #tpu.memory_space<smem>>, %arg5: memref<1x1xf32, #tpu.memory_space<vmem>>) attributes {dimension_semantics = [], scalar_prefetch = 0 : i64, scratch_operands = 0 : i64, tpu.core_type = #tpu.core_type<tc>} {
    %c0 = arith.constant 0 : index
    %c0_0 = arith.constant 0 : index
    %0 = vector.load %arg0[%c0, %c0_0] : memref<1x160xf32, #tpu.memory_space<vmem>>, vector<1x128xf32>
    %c0_1 = arith.constant 0 : index
    %c128 = arith.constant 128 : index
    %1 = vector.load %arg0[%c0_1, %c128] : memref<1x160xf32, #tpu.memory_space<vmem>>, vector<1x32xf32>
    %c0_2 = arith.constant 0 : index
    %c0_3 = arith.constant 0 : index
    %2 = vector.load %arg1[%c0_2, %c0_3] : memref<16x128xf32, #tpu.memory_space<vmem>>, vector<16x128xf32>
    %cst = arith.constant dense<0.000000e+00> : vector<1x16xf32>
    %3 = tpu.matmul %0, %2, %cst {dimension_numbers = #tpu.dot_dimension_numbers<[1], [1], [0], [0], [0, 0, 1, 0], [], []>} : vector<1x128xf32>, vector<16x128xf32>, vector<1x16xf32> -> vector<1x16xf32>
    %c4 = arith.constant 4 : index
    %c0_4 = arith.constant 0 : index
    %4 = vector.load %arg3[%c4, %c0_4] : memref<8x96xf32, #tpu.memory_space<vmem>>, vector<1x16xf32>
    %5 = arith.addf %3, %4 : vector<1x16xf32>
    %cst_5 = arith.constant 0.000000e+00 : f32
    %6 = vector.broadcast %cst_5 : f32 to vector<1x16xf32>
    %7 = arith.maximumf %5, %6 : vector<1x16xf32>
    %c0_6 = arith.constant 0 : index
    %8 = memref.load %arg4[%c0_6] : memref<4xf32, #tpu.memory_space<smem>>
    %c1 = arith.constant 1 : index
    %9 = memref.load %arg4[%c1] : memref<4xf32, #tpu.memory_space<smem>>
    %c2 = arith.constant 2 : index
    %10 = memref.load %arg4[%c2] : memref<4xf32, #tpu.memory_space<smem>>
    %c0_7 = arith.constant 0 : index
    %c0_8 = arith.constant 0 : index
    %11 = vector.load %arg2[%c0_7, %c0_8] : memref<48x96xf32, #tpu.memory_space<vmem>>, vector<32x96xf32>
    %cst_9 = arith.constant dense<0.000000e+00> : vector<1x96xf32>
    %12 = tpu.matmul %1, %11, %cst_9 {dimension_numbers = #tpu.dot_dimension_numbers<[1], [0], [0], [1], [0, 0, 1, 1], [], []>} : vector<1x32xf32>, vector<32x96xf32>, vector<1x96xf32> -> vector<1x96xf32>
    %c32 = arith.constant 32 : index
    %c0_10 = arith.constant 0 : index
    %13 = vector.load %arg2[%c32, %c0_10] : memref<48x96xf32, #tpu.memory_space<vmem>>, vector<16x96xf32>
    %cst_11 = arith.constant dense<0.000000e+00> : vector<1x96xf32>
    %14 = tpu.matmul %7, %13, %cst_11 {dimension_numbers = #tpu.dot_dimension_numbers<[1], [0], [0], [1], [0, 0, 1, 1], [], []>} : vector<1x16xf32>, vector<16x96xf32>, vector<1x96xf32> -> vector<1x96xf32>
    %15 = arith.addf %12, %14 : vector<1x96xf32>
    %c1_12 = arith.constant 1 : index
    %c0_13 = arith.constant 0 : index
    %16 = vector.load %arg3[%c1_12, %c0_13] : memref<8x96xf32, #tpu.memory_space<vmem>>, vector<1x96xf32>
    %17 = vector.broadcast %8 : f32 to vector<1x96xf32>
    %18 = arith.mulf %17, %16 : vector<1x96xf32>
    %19 = arith.addf %15, %18 : vector<1x96xf32>
    %c2_14 = arith.constant 2 : index
    %c0_15 = arith.constant 0 : index
    %20 = vector.load %arg3[%c2_14, %c0_15] : memref<8x96xf32, #tpu.memory_space<vmem>>, vector<1x96xf32>
    %21 = vector.broadcast %9 : f32 to vector<1x96xf32>
    %22 = arith.mulf %21, %20 : vector<1x96xf32>
    %23 = arith.addf %19, %22 : vector<1x96xf32>
    %c0_16 = arith.constant 0 : index
    %c0_17 = arith.constant 0 : index
    %24 = vector.load %arg3[%c0_16, %c0_17] : memref<8x96xf32, #tpu.memory_space<vmem>>, vector<1x96xf32>
    %25 = arith.addf %23, %24 : vector<1x96xf32>
    %cst_18 = arith.constant 0.000000e+00 : f32
    %26 = vector.broadcast %cst_18 : f32 to vector<1x96xf32>
    %27 = arith.maximumf %25, %26 : vector<1x96xf32>
    %c3 = arith.constant 3 : index
    %c0_19 = arith.constant 0 : index
    %28 = vector.load %arg3[%c3, %c0_19] : memref<8x96xf32, #tpu.memory_space<vmem>>, vector<1x96xf32>
    %29 = arith.mulf %27, %28 : vector<1x96xf32>
    %cst_20 = arith.constant dense<0.000000e+00> : vector<1xf32>
    %30 = vector.multi_reduction <add>, %29, %cst_20 [1] : vector<1x96xf32> to vector<1xf32>
    %31 = vector.shape_cast %30 : vector<1xf32> to vector<1x1xf32>
    %32 = vector.broadcast %10 : f32 to vector<1x1xf32>
    %33 = arith.addf %31, %32 : vector<1x1xf32>
    %34 = arith.negf %33 : vector<1x1xf32>
    %35 = math.exp %34 : vector<1x1xf32>
    %cst_21 = arith.constant 1.000000e+00 : f32
    %36 = vector.broadcast %cst_21 : f32 to vector<1x1xf32>
    %37 = arith.addf %36, %35 : vector<1x1xf32>
    %38 = arith.divf %36, %37 : vector<1x1xf32>
    %c0_22 = arith.constant 0 : index
    %c0_23 = arith.constant 0 : index
    %39 = vector.load %arg5[%c0_22, %c0_23] : memref<1x1xf32, #tpu.memory_space<vmem>>, vector<1x1xf32>
    tpu.vector_store %arg5[%c0_22, %c0_23], %38 {strides = array<i32>} : memref<1x1xf32, #tpu.memory_space<vmem>>, vector<1x1xf32>,
    return
  }
}

</mosaic_0001>

<llo_original>
// kernel: _forward_text_jit.1
$region0: #{_forward_text_jit.1}
  #allocation0 [shape = 'u32[]', space=smem, size = 0x4, offset = 0x4, fixed_abs, tag = 'smem constant byte address 0x4 - core index']
  #allocation1 [shape = 'u32[144,128]{1,0:T(1,128)}', space=vmem, size = 0x12000, scoped, tag = 'internal scratch']
  %s0 = inlined_call_operand.vmem [shape: f32[1,160], index: 0, kind: input, shape index: {}]
  %s1 = inlined_call_operand.vmem [shape: f32[16,128], index: 1, kind: input, shape index: {}]
  %s2 = inlined_call_operand.vmem [shape: f32[48,96], index: 2, kind: input, shape index: {}]
  %s3 = inlined_call_operand.vmem [shape: f32[8,96], index: 3, kind: input, shape index: {}]
  %s4 = inlined_call_operand.vmem [shape: f32[4], index: 4, kind: input, shape index: {}]
  %s5 = inlined_call_operand.hbm [shape: f32[1,1], index: 5, kind: output, shape index: {}]
  %s6 = sld [smem:[#allocation0]]
  $region34: #{_forward_text_jit.1} parent=0
    _
  %s8 = ssub.s32 1, %s6
  %s9 = scalar_select 0, %s8, %s6
  $region1: #{_forward_text_jit.1} parent=0
    #allocation2 [shape = 'u8[512]{0}', space=smem, size = 0x200, scoped, tag = 'input window, operand 4, single buffered']
    #allocation3 [shape = 's32[1]{0}', space=sflag, size = 0x4, scoped, tag = 'scoped memory for _forward_text_jit.1']
    #allocation4 [shape = 's32[1]{0}', space=sflag, size = 0x4, scoped, tag = 'scoped memory for _forward_text_jit.1']
    #allocation5 [shape = 'u8[512]{0}', space=vmem, size = 0x400, scoped, tag = 'output window, operand 0, single buffered']
    %10 = vsyncpa [#allocation4], 0
    %11 = vsyncpa [#allocation3], 0
    // Predicated region
    $region2: #{_forward_text_jit.1} parent=1 // pred_check
      _
    $region3: #{_forward_text_jit.1} parent=1 // pred_check_branch
      %13 = sbr.rel (0) target = $region5
    $region4: #{_forward_text_jit.1} parent=1 // pred_region
      _
    $region5: #{_forward_text_jit.1} parent=1 // pred_fallthru
      _
    // Predicated region
    $region6: #{_forward_text_jit.1} parent=1 // pred_check
      _
    $region7: #{_forward_text_jit.1} parent=1 // pred_check_branch
      %15 = sbr.rel (0) target = $region9
    $region8: #{_forward_text_jit.1} parent=1 // pred_region
      _
    $region9: #{_forward_text_jit.1} parent=1 // pred_fallthru
      _
    // Predicated region
    $region10: #{_forward_text_jit.1} parent=1 // pred_check
      _
    $region11: #{_forward_text_jit.1} parent=1 // pred_check_branch
      %17 = sbr.rel (0) target = $region13
    $region12: #{_forward_text_jit.1} parent=1 // pred_region
      _
    $region13: #{_forward_text_jit.1} parent=1 // pred_fallthru
      _
    // Predicated region
    $region14: #{_forward_text_jit.1} parent=1 // pred_check
      _
    $region15: #{_forward_text_jit.1} parent=1 // pred_check_branch
      %19 = sbr.rel (0) target = $region17
    $region16: #{_forward_text_jit.1} parent=1 // pred_region
      _
    $region17: #{_forward_text_jit.1} parent=1 // pred_fallthru
      _
    // Predicated region
    $region18: #{_forward_text_jit.1} parent=1 // pred_check
      _
    $region19: #{_forward_text_jit.1} parent=1 // pred_check_branch
      %21 = sbr.rel (0) target = $region21
    $region20: #{_forward_text_jit.1} parent=1 // pred_region
      %s23 = ssub.s32 16, 16
      %24 = vsyncadd [#allocation4], %s23
      %s26 = sshll.u32 %s4, 4
      %s27 = int_to_ptr.vmem [resolvable:$true] %s26
      %29 = dma.vmem_to_smem %s27, 16, [#allocation2], [#allocation4]
    $region21: #{_forward_text_jit.1} parent=1 // pred_fallthru
      _
    // Predicated region
    $region22: #{_forward_text_jit.1} parent=1 // pred_check
      _
    $region23: #{_forward_text_jit.1} parent=1 // pred_check_branch
      %31 = sbr.rel (0) target = $region25
    $region24: #{_forward_text_jit.1} parent=1 // pred_region
      %32 = dma.done [#allocation4], 16
    $region25: #{_forward_text_jit.1} parent=1 // pred_fallthru
      _
    %33 = sfence
    %v34 = vld [vmem:[%s0] sm:$0x1]
    %v35 = vld [vmem:[%s0 + $0x1] sm:$0x1]
    %v36 = vld [vmem:[%s1] sm:$0xff]
    %v37 = vld [vmem:[%s1 + $0x8] sm:$0xff]
    %v38 = vld [vmem:[%s3 + $0x4] sm:$0x1]
    %39 = vmatprep.subr.mxu0 0.0
    %40 = vmatpush1.xpose.msra.mxu0 0.0
    %41 = vmatprep.subr.mxu0 0.0
    %42 = vmatpush1.xpose.msra.mxu0 0.0
    %43 = vmatprep.subr.mxu0 0.0
    %44 = vmatpush1.xpose.msra.mxu0 0.0
    %45 = vmatprep.subr.mxu0 0.0
    %46 = vmatpush1.xpose.msra.mxu0 0.0
    %47 = vmatprep.subr.mxu0 0.0
    %48 = vmatpush1.xpose.msra.mxu0 0.0
    %49 = vmatprep.subr.mxu0 0.0
    %50 = vmatpush1.xpose.msra.mxu0 0.0
    %51 = vmatprep.subr.mxu0 0.0
    %52 = vmatpush1.xpose.msra.mxu0 0.0
    %53 = vmatprep.subr.mxu0 0.0
    %54 = vmatpush1.xpose.msra.mxu0 0.0
    %55 = vmatprep.subr.mxu0 0.0
    %56 = vmatpush1.xpose.msra.mxu0 0.0
    %57 = vmatprep.subr.mxu0 0.0
    %58 = vmatpush1.xpose.msra.mxu0 0.0
    %59 = vmatprep.subr.mxu0 0.0
    %60 = vmatpush1.xpose.msra.mxu0 0.0
    %61 = vmatprep.subr.mxu0 0.0
    %62 = vmatpush1.xpose.msra.mxu0 0.0
    %63 = vmatprep.subr.mxu0 0.0
    %64 = vmatpush1.xpose.msra.mxu0 0.0
    %65 = vmatprep.subr.mxu0 0.0
    %66 = vmatpush1.xpose.msra.mxu0 0.0
    %67 = vmatprep.subr.mxu0 0.0
    %68 = vmatpush1.xpose.msra.mxu0 %v37
    %69 = vmatprep.subr.mxu0 0.0
    %70 = vmatpush1.xpose.msra.mxu0 %v36
    %71 = vmatprep.subr.mxu0 0.0
    %72 = vmatpush2.xpose.msra.mxu0 0.0
    %73 = vmatprep.subr.mxu0 0.0
    %74 = vmatpush2.xpose.msra.mxu0 0.0
    %75 = vmatprep.subr.mxu0 0.0
    %76 = vmatpush2.xpose.msra.mxu0 0.0
    %77 = vmatprep.subr.mxu0 0.0
    %78 = vmatpush2.xpose.msra.mxu0 0.0
    %79 = vmatprep.subr.mxu0 0.0
    %80 = vmatpush2.xpose.msra.mxu0 0.0
    %81 = vmatprep.subr.mxu0 0.0
    %82 = vmatpush2.xpose.msra.mxu0 0.0
    %83 = vmatprep.subr.mxu0 0.0
    %84 = vmatpush2.xpose.msra.mxu0 0.0
    %85 = vmatprep.subr.mxu0 0.0
    %86 = vmatpush2.xpose.msra.mxu0 0.0
    %87 = vmatprep.subr.mxu0 0.0
    %88 = vmatpush2.xpose.msra.mxu0 0.0
    %89 = vmatprep.subr.mxu0 0.0
    %90 = vmatpush2.xpose.msra.mxu0 0.0
    %91 = vmatprep.subr.mxu0 0.0
    %92 = vmatpush2.xpose.msra.mxu0 0.0
    %93 = vmatprep.subr.mxu0 0.0
    %94 = vmatpush2.xpose.msra.mxu0 0.0
    %95 = vmatprep.subr.mxu0 0.0
    %96 = vmatpush2.xpose.msra.mxu0 0.0
    %97 = vmatprep.subr.mxu0 0.0
    %98 = vmatpush2.xpose.msra.mxu0 0.0
    %99 = vmatprep.subr.mxu0 0.0
    %100 = vmatpush2.xpose.msra.mxu0 0.0
    %101 = vmatprep.subr.mxu0 0.0
    %102 = vmatpush2.xpose.msra.mxu0 0.0
    %103 = vmatprep.mubr.f32.mxu0 0.0
    %104 = vmatmul.mubr.f32.gmra.mxu0 %v34
    %v105 = vpop.f32.mrf.mxu0
    %v106 = vadd.f32 %v38, %v105
    %v107 = vpop.f32.mrf.mxu0
    %108 = vdwg.mxu0
    %v109 = vmax.f32 %v106, 0.0
    %s110 = sld [smem:[#allocation2]]
    %s111 = sld [smem:[#allocation2 + $0x1]]
    %s112 = sld [smem:[#allocation2 + $0x2]]
    %v113 = vld [vmem:[%s2] sm:$0xff]
    %v114 = vld [vmem:[%s2 + $0x8] sm:$0xff]
    %v115 = vld [vmem:[%s2 + $0x10] sm:$0xff]
    %v116 = vld [vmem:[%s2 + $0x18] sm:$0xff]
    %v117 = vld [vmem:[%s2 + $0x20] sm:$0xff]
    %v118 = vld [vmem:[%s2 + $0x28] sm:$0xff]
    %vm119 = vcmask 130048
    %v121 = vsel %vm119, %v109, 0
    %123 = vmatprep.subr.mxu0 0.0
    %124 = vmatpush1.msra.mxu0 0.0
    %125 = vmatprep.subr.mxu0 0.0
    %126 = vmatpush1.msra.mxu0 0.0
    %127 = vmatprep.subr.mxu0 0.0
    %128 = vmatpush1.msra.mxu0 0.0
    %129 = vmatprep.subr.mxu0 0.0
    %130 = vmatpush1.msra.mxu0 0.0
    %131 = vmatprep.subr.mxu0 0.0
    %132 = vmatpush1.msra.mxu0 0.0
    %133 = vmatprep.subr.mxu0 0.0
    %134 = vmatpush1.msra.mxu0 0.0
    %135 = vmatprep.subr.mxu0 0.0
    %136 = vmatpush1.msra.mxu0 0.0
    %137 = vmatprep.subr.mxu0 0.0
    %138 = vmatpush1.msra.mxu0 0.0
    %139 = vmatprep.subr.mxu0 0.0
    %140 = vmatpush1.msra.mxu0 0.0
    %141 = vmatprep.subr.mxu0 0.0
    %142 = vmatpush1.msra.mxu0 0.0
    %143 = vmatprep.subr.mxu0 0.0
    %144 = vmatpush1.msra.mxu0 0.0
    %145 = vmatprep.subr.mxu0 0.0
    %146 = vmatpush1.msra.mxu0 0.0
    %147 = vmatprep.subr.mxu0 0.0
    %148 = vmatpush1.msra.mxu0 0.0
    %149 = vmatprep.subr.mxu0 0.0
    %150 = vmatpush1.msra.mxu0 0.0
    %151 = vmatprep.subr.mxu0 0.0
    %152 = vmatpush1.msra.mxu0 %v118
    %153 = vmatprep.subr.mxu0 0.0
    %154 = vmatpush1.msra.mxu0 %v117
    %155 = vmatprep.subr.mxu0 0.0
    %156 = vmatpush2.msra.mxu0 0.0
    %157 = vmatprep.subr.mxu0 0.0
    %158 = vmatpush2.msra.mxu0 0.0
    %159 = vmatprep.subr.mxu0 0.0
    %160 = vmatpush2.msra.mxu0 0.0
    %161 = vmatprep.subr.mxu0 0.0
    %162 = vmatpush2.msra.mxu0 0.0
    %163 = vmatprep.subr.mxu0 0.0
    %164 = vmatpush2.msra.mxu0 0.0
    %165 = vmatprep.subr.mxu0 0.0
    %166 = vmatpush2.msra.mxu0 0.0
    %167 = vmatprep.subr.mxu0 0.0
    %168 = vmatpush2.msra.mxu0 0.0
    %169 = vmatprep.subr.mxu0 0.0
    %170 = vmatpush2.msra.mxu0 0.0
    %171 = vmatprep.subr.mxu0 0.0
    %172 = vmatpush2.msra.mxu0 0.0
    %173 = vmatprep.subr.mxu0 0.0
    %174 = vmatpush2.msra.mxu0 0.0
    %175 = vmatprep.subr.mxu0 0.0
    %176 = vmatpush2.msra.mxu0 0.0
    %177 = vmatprep.subr.mxu0 0.0
    %178 = vmatpush2.msra.mxu0 0.0
    %179 = vmatprep.subr.mxu0 0.0
    %180 = vmatpush2.msra.mxu0 0.0
    %181 = vmatprep.subr.mxu0 0.0
    %182 = vmatpush2.msra.mxu0 0.0
    %183 = vmatprep.subr.mxu0 0.0
    %184 = vmatpush2.msra.mxu0 0.0
    %185 = vmatprep.subr.mxu0 0.0
    %186 = vmatpush2.msra.mxu0 0.0
    %187 = vmatprep.mubr.f32.mxu0 0.0
    %188 = vmatmul.mubr.f32.gmra.mxu0 %v121
    %v189 = vpop.f32.mrf.mxu0
    %v190 = vadd.f32 0.0, %v189
    %v191 = vpop.f32.mrf.mxu0
    %192 = vdwg.mxu0
    %vm193 = vcmask 261120
    %v195 = vsel %vm193, %v35, 0
    %197 = vmatprep.subr.mxu0 0.0
    %198 = vmatpush1.msra.mxu0 0.0
    %199 = vmatprep.subr.mxu0 0.0
    %200 = vmatpush1.msra.mxu0 0.0
    %201 = vmatprep.subr.mxu0 0.0
    %202 = vmatpush1.msra.mxu0 0.0
    %203 = vmatprep.subr.mxu0 0.0
    %204 = vmatpush1.msra.mxu0 0.0
    %205 = vmatprep.subr.mxu0 0.0
    %206 = vmatpush1.msra.mxu0 0.0
    %207 = vmatprep.subr.mxu0 0.0
    %208 = vmatpush1.msra.mxu0 0.0
    %209 = vmatprep.subr.mxu0 0.0
    %210 = vmatpush1.msra.mxu0 0.0
    %211 = vmatprep.subr.mxu0 0.0
    %212 = vmatpush1.msra.mxu0 0.0
    %213 = vmatprep.subr.mxu0 0.0
    %214 = vmatpush1.msra.mxu0 0.0
    %215 = vmatprep.subr.mxu0 0.0
    %216 = vmatpush1.msra.mxu0 0.0
    %217 = vmatprep.subr.mxu0 0.0
    %218 = vmatpush1.msra.mxu0 0.0
    %219 = vmatprep.subr.mxu0 0.0
    %220 = vmatpush1.msra.mxu0 0.0
    %221 = vmatprep.subr.mxu0 0.0
    %222 = vmatpush1.msra.mxu0 %v116
    %223 = vmatprep.subr.mxu0 0.0
    %224 = vmatpush1.msra.mxu0 %v115
    %225 = vmatprep.subr.mxu0 0.0
    %226 = vmatpush1.msra.mxu0 %v114
    %227 = vmatprep.subr.mxu0 0.0
    %228 = vmatpush1.msra.mxu0 %v113
    %229 = vmatprep.subr.mxu0 0.0
    %230 = vmatpush2.msra.mxu0 0.0
    %231 = vmatprep.subr.mxu0 0.0
    %232 = vmatpush2.msra.mxu0 0.0
    %233 = vmatprep.subr.mxu0 0.0
    %234 = vmatpush2.msra.mxu0 0.0
    %235 = vmatprep.subr.mxu0 0.0
    %236 = vmatpush2.msra.mxu0 0.0
    %237 = vmatprep.subr.mxu0 0.0
    %238 = vmatpush2.msra.mxu0 0.0
    %239 = vmatprep.subr.mxu0 0.0
    %240 = vmatpush2.msra.mxu0 0.0
    %241 = vmatprep.subr.mxu0 0.0
    %242 = vmatpush2.msra.mxu0 0.0
    %243 = vmatprep.subr.mxu0 0.0
    %244 = vmatpush2.msra.mxu0 0.0
    %245 = vmatprep.subr.mxu0 0.0
    %246 = vmatpush2.msra.mxu0 0.0
    %247 = vmatprep.subr.mxu0 0.0
    %248 = vmatpush2.msra.mxu0 0.0
    %249 = vmatprep.subr.mxu0 0.0
    %250 = vmatpush2.msra.mxu0 0.0
    %251 = vmatprep.subr.mxu0 0.0
    %252 = vmatpush2.msra.mxu0 0.0
    %253 = vmatprep.subr.mxu0 0.0
    %254 = vmatpush2.msra.mxu0 0.0
    %255 = vmatprep.subr.mxu0 0.0
    %256 = vmatpush2.msra.mxu0 0.0
    %257 = vmatprep.subr.mxu0 0.0
    %258 = vmatpush2.msra.mxu0 0.0
    %259 = vmatprep.subr.mxu0 0.0
    %260 = vmatpush2.msra.mxu0 0.0
    %261 = vmatprep.mubr.f32.mxu0 0.0
    %262 = vmatmul.mubr.f32.gmra.mxu0 %v195
    %v263 = vpop.f32.mrf.mxu0
    %v264 = vadd.f32 %v190, %v263
    %v265 = vpop.f32.mrf.mxu0
    %266 = vdwg.mxu0
    %v267 = vld [vmem:[%s3 + $0x1] sm:$0x1]
    %v268 = vstv %s110
    %v269 = vmul.f32 %v268, %v267
    %v270 = vadd.f32 %v264, %v269
    %v271 = vld [vmem:[%s3 + $0x2] sm:$0x1]
    %v272 = vstv %s111
    %v273 = vmul.f32 %v272, %v271
    %v274 = vadd.f32 %v270, %v273
    %v275 = vld [vmem:[%s3] sm:$0x1]
    %v276 = vadd.f32 %v274, %v275
    %v277 = vmax.f32 %v276, 0.0
    %v278 = vld [vmem:[%s3 + $0x3] sm:$0x1]
    %v279 = vmul.f32 %v277, %v278
    %vm280 = vcmask 778240
    %v281 = vsel %vm280, %v279, 0.0
    %282 = vadd.xlane.f32.xlu0 %v281
    %v283 = vpop.xlane.xlu0 %282
    %v284 = vstv %s112
    %v285 = vadd.f32 %v283, %v284
    %v286 = vxor.u32 %v285, 2147483648
    %v287 = vmul.f32 %v286, 1.442695
    %v288 = vpow.pop %v287
    %v289 = vadd.f32 %v288, 1.0
    %v290 = vrcp.pop %v289
    %v291 = vmul.f32 1.0, %v290
    %vm292 = vcmask 0
    %293 = vst.msk [vmem:[#allocation5] sm:$0x1] %vm292, %v291
    // Predicated region
    $region26: #{_forward_text_jit.1} parent=1 // pred_check
      _
    $region27: #{_forward_text_jit.1} parent=1 // pred_check_branch
      %295 = sbr.rel (0) target = $region29
    $region28: #{_forward_text_jit.1} parent=1 // pred_region
      %s297 = ssub.s32 16, 16
      %298 = vsyncadd [#allocation3], %s297
      %s300 = sshll.u32 [#allocation5], 4
      %s301 = int_to_ptr.vmem [resolvable:$true] %s300
      %303 = dma.vmem_to_hbm [thread:$0]  %s301, 16, %s5, [#allocation3]
    $region29: #{_forward_text_jit.1} parent=1 // pred_fallthru
      _
    // Predicated region
    $region30: #{_forward_text_jit.1} parent=1 // pred_check
      _
    $region31: #{_forward_text_jit.1} parent=1 // pred_check_branch
      %305 = sbr.rel (0) target = $region33
    $region32: #{_forward_text_jit.1} parent=1 // pred_region
      %306 = dma.done [#allocation3], 16
    $region33: #{_forward_text_jit.1} parent=1 // pred_fallthru
      _
    %307 = vsyncpa [#allocation3], 1
    %308 = vsyncpa [#allocation4], 1

</llo_original>
